<compile_context>
chip_gen: v6e
topology: v6e:2x2x1
jax: 0.10.0
libtpu: 0.0.40
codegen_flags: <defaults>
</compile_context>

<pallas_src>
import functools

import jax
import jax.numpy as jnp
from jax.experimental import pallas as pl
from jax.experimental.pallas import tpu as pltpu


def _round_up(x, m):
    return ((x + m - 1) // m) * m


def _interp_matrix(out_size, in_size, dtype=jnp.float32):
    """Per-axis linear interpolation weights matching
    F.interpolate(mode='trilinear', align_corners=False): out = M @ in."""
    if out_size == in_size:
        return jnp.eye(out_size, dtype=dtype)
    scale = in_size / out_size
    o = jnp.arange(out_size, dtype=jnp.float32)
    src = jnp.maximum((o + 0.5) * scale - 0.5, 0.0)
    i0 = jnp.clip(jnp.floor(src).astype(jnp.int32), 0, in_size - 1)
    i1 = jnp.minimum(i0 + 1, in_size - 1)
    w1 = src - i0.astype(jnp.float32)
    w0 = 1.0 - w1
    m = jnp.zeros((out_size, in_size), dtype)
    rows = jnp.arange(out_size)
    m = m.at[rows, i0].add(w0.astype(dtype))
    m = m.at[rows, i1].add(w1.astype(dtype))
    return m


def _trilinear_resize(x, out_dhw):
    """x: (B, C, D, H, W) -> (B, C, *out_dhw); PyTorch trilinear, align_corners=False."""
    _, _, d, h, w = x.shape
    md = _interp_matrix(out_dhw[0], d)
    mh = _interp_matrix(out_dhw[1], h)
    mw = _interp_matrix(out_dhw[2], w)
    return jnp.einsum('bcxyz,Dx,Hy,Wz->bcDHW', x.astype(jnp.float32), md, mh, mw)


# ---------------------------------------------------------------------------
# Pallas kernel: fused 1x1x1-conv projection + gt-masked log-softmax/softmax
# + per-voxel KL, one (batch sample, spatial tile) per grid step.
# ---------------------------------------------------------------------------
def _dsd_loss_kernel(x_ref, t_ref, lab_ref, w_ref, b_ref, out_ref, *,
                     inv_tau, num_valid):
    # x_ref:   (1, C_in, TN) f32   student features (channels on sublanes)
    # t_ref:   (1, C,    TN) f32   resized teacher logits
    # lab_ref: (1, 1,    TN) i32   gt class index per voxel
    # w_ref:   (C, C_in)     bf16  projector weight
    # b_ref:   (C, 1)        f32   projector bias
    # out_ref: (1, 1, TN)    f32   per-voxel KL (already summed over classes)
    x = x_ref[0].astype(jnp.bfloat16)                              # (C_in, TN)
    y = jnp.dot(w_ref[...], x,
                preferred_element_type=jnp.float32) + b_ref[...]   # (C, TN) f32

    c, tn = y.shape
    lab = lab_ref[0]                                               # (1, TN) int32
    class_ids = jax.lax.broadcasted_iota(jnp.int32, (c, tn), 0)
    penalty = jnp.where(class_ids == lab, 1000.0, 0.0)             # 1000 * gt_mask

    s = y * inv_tau - penalty
    t = t_ref[0] * inv_tau - penalty

    # Student: stable log-softmax over the class (sublane) axis.
    s_max = jnp.max(s, axis=0, keepdims=True)
    s_lse = jnp.log(jnp.sum(jnp.exp(s - s_max), axis=0, keepdims=True)) + s_max
    s_ls = s - s_lse

    # Teacher: one exp pass gives both softmax probs and log-softmax.
    t_max = jnp.max(t, axis=0, keepdims=True)
    t_shift = t - t_max
    t_exp = jnp.exp(t_shift)
    t_den = jnp.sum(t_exp, axis=0, keepdims=True)
    t_ls = t_shift - jnp.log(t_den)
    t_p = t_exp / t_den

    kl = jnp.sum(t_p * (t_ls - s_ls), axis=0, keepdims=True)       # (1, TN)

    if num_valid is not None:
        # Zero KL on padded lanes so the wrapper can sum the whole output.
        lane = (jax.lax.broadcasted_iota(jnp.int32, (1, tn), 1)
                + pl.program_id(1) * tn)
        kl = jnp.where(lane < num_valid, kl, 0.0)

    out_ref[0] = kl


# ---------------------------------------------------------------------------
# Wrapper: resize glue, channel-first flattening / padding, pallas_call,
# final batchmean reduction + scaling.
# ---------------------------------------------------------------------------
def dsd_loss7_forward(feat_student, logits_teacher, label, weight, bias,
                      *, tau=1.0, loss_weight=1.0, tile_n=16384,
                      vmem_block_budget=10 * 1024 * 1024):
    """feat_student: (B, C_in, D, H, W); logits_teacher: (B, C, Dt, Ht, Wt);
    label: (B, 1, Dl, Hl, Wl) float class ids; weight: (C, C_in, 1, 1, 1); bias: (C,)."""
    B, C_in, D, H, W = feat_student.shape
    C = weight.shape[0]
    S = D * H * W

    # ---- glue: trilinear resize of teacher logits & label to student grid ----
    t_logits = _trilinear_resize(logits_teacher, (D, H, W))            # (B, C, D, H, W)
    lab = _trilinear_resize(label, (D, H, W)).astype(jnp.int32)        # trunc == .long()

    # ---- channels-first flatten (free reshapes of the native layouts) ----
    x_flat = feat_student.reshape(B, C_in, S).astype(jnp.float32)
    t_flat = t_logits.reshape(B, C, S)
    lab_flat = lab.reshape(B, 1, S)

    # ---- pick the spatial (lane) tile: as big as the VMEM budget allows ----
    bytes_per_voxel = 2 * (C_in * 4 + C * 4 + 4 + 4)   # double-buffered blocks
    cap = max(128, (vmem_block_budget // bytes_per_voxel) // 128 * 128)
    tn = min(tile_n, cap, _round_up(S, 128))
    tn = max(128, (tn // 128) * 128)

    s_pad = _round_up(S, tn)
    if s_pad != S:
        pad = ((0, 0), (0, 0), (0, s_pad - S))
        x_flat = jnp.pad(x_flat, pad)
        t_flat = jnp.pad(t_flat, pad)
        lab_flat = jnp.pad(lab_flat, pad)
    num_tiles = s_pad // tn

    w_mat = weight.reshape(C, C_in).astype(jnp.bfloat16)
    b_mat = bias.reshape(C, 1).astype(jnp.float32)

    kernel = functools.partial(
        _dsd_loss_kernel,
        inv_tau=float(1.0 / tau),
        num_valid=(S if s_pad != S else None))

    flops = 2 * B * s_pad * C_in * C + 10 * B * s_pad * C
    transcendentals = B * s_pad * (2 * C + 2)
    bytes_accessed = (x_flat.size * 4 + t_flat.size * 4 + lab_flat.size * 4
                      + B * s_pad * 4 + w_mat.size * 2 + b_mat.size * 4)

    per_voxel_kl = pl.pallas_call(
        kernel,
        out_shape=jax.ShapeDtypeStruct((B, 1, s_pad), jnp.float32),
        grid_spec=pltpu.PrefetchScalarGridSpec(
            num_scalar_prefetch=0,
            grid=(B, num_tiles),
            in_specs=[
                pl.BlockSpec((1, C_in, tn), lambda b, i: (b, 0, i)),
                pl.BlockSpec((1, C, tn), lambda b, i: (b, 0, i)),
                pl.BlockSpec((1, 1, tn), lambda b, i: (b, 0, i)),
                # Constant index maps -> weight / bias stay VMEM-resident, no re-DMA.
                pl.BlockSpec((C, C_in), lambda b, i: (0, 0)),
                pl.BlockSpec((C, 1), lambda b, i: (0, 0)),
            ],
            out_specs=pl.BlockSpec((1, 1, tn), lambda b, i: (b, 0, i)),
        ),
        compiler_params=pltpu.CompilerParams(
            dimension_semantics=("parallel", "parallel")),
        cost_estimate=pl.CostEstimate(
            flops=flops,
            transcendentals=transcendentals,
            bytes_accessed=bytes_accessed),
    )(x_flat, t_flat, lab_flat, w_mat, b_mat)

    # ---- batchmean over the flattened (N, C) rows, * tau^2 * loss_weight ----
    n_rows = B * S
    kl_sum = jnp.sum(per_voxel_kl)          # padded lanes already zeroed in-kernel
    return loss_weight * (tau ** 2) * kl_sum / n_rows


# ---------------------------------------------------------------------------
# Pure-JAX reference (same bf16-operand / f32-accum projection) for checking.
# ---------------------------------------------------------------------------
def dsd_loss7_reference(feat_student, logits_teacher, label, weight, bias,
                        *, tau=1.0, loss_weight=1.0):
    B, C_in, D, H, W = feat_student.shape
    C = weight.shape[0]
    S = D * H * W
    t_logits = _trilinear_resize(logits_teacher, (D, H, W)).reshape(B, C, S)
    lab = _trilinear_resize(label, (D, H, W)).astype(jnp.int32).reshape(B, S)
    x = feat_student.reshape(B, C_in, S)
    y = jnp.einsum('ci,bis->bcs',
                   weight.reshape(C, C_in).astype(jnp.bfloat16),
                   x.astype(jnp.bfloat16),
                   preferred_element_type=jnp.float32) + bias.reshape(1, C, 1)
    s_rows = jnp.transpose(y, (0, 2, 1)).reshape(-1, C)
    t_rows = jnp.transpose(t_logits, (0, 2, 1)).reshape(-1, C)
    g = lab.reshape(-1)
    mask = jax.nn.one_hot(g, C, dtype=jnp.float32)
    s_ls = jax.nn.log_softmax(s_rows / tau - 1000.0 * mask, axis=-1)
    t_ls = jax.nn.log_softmax(t_rows / tau - 1000.0 * mask, axis=-1)
    t_p = jnp.exp(t_ls)
    kl = jnp.sum(t_p * (t_ls - s_ls))
    return loss_weight * (tau ** 2) * kl / (B * S)


def _run_case(key, B, C_in, num_classes, student_dhw, teacher_dhw, tau, loss_weight):
    k_f, k_t, k_l, k_w, k_b = jax.random.split(key, 5)
    D, H, W = student_dhw
    Dt, Ht, Wt = teacher_dhw

    feat_student = jax.random.normal(k_f, (B, C_in, D, H, W), jnp.float32)
    logits_teacher = jax.random.normal(k_t, (B, num_classes, Dt, Ht, Wt), jnp.float32)
    label = jax.random.randint(k_l, (B, 1, Dt, Ht, Wt), 0, num_classes).astype(jnp.float32)

    # Conv3d(in_chans, num_classes, 1, 1, 0) parameters (kaiming-like scale).
    weight = jax.random.normal(k_w, (num_classes, C_in, 1, 1, 1), jnp.float32) * (2.0 / C_in) ** 0.5
    bias = jax.random.normal(k_b, (num_classes,), jnp.float32) * 0.01

    loss = dsd_loss7_forward(feat_student, logits_teacher, label, weight, bias,
                             tau=tau, loss_weight=loss_weight)
    loss = jax.block_until_ready(loss)

    ref = dsd_loss7_reference(feat_student, logits_teacher, label, weight, bias,
                              tau=tau, loss_weight=loss_weight)
    ref = jax.block_until_ready(ref)

    assert loss.shape == ()
    assert bool(jnp.isfinite(loss))
    rel = abs(float(loss) - float(ref)) / max(1.0, abs(float(ref)))
    assert rel <= 2e-3, (float(loss), float(ref), rel)


if __name__ == "__main__":
    key = jax.random.PRNGKey(0)
    k1, k2 = jax.random.split(key, 2)

    # Case 1: small shapes consistent with the module; spatial size is a
    # multiple of 128 -> no padding path (the common production case).
    _run_case(k1, B=2, C_in=32, num_classes=8,
              student_dhw=(8, 8, 8), teacher_dhw=(4, 4, 4),
              tau=1.0, loss_weight=1.0)

    # Case 2: ragged spatial size (8*7*7 = 392 voxels) exercising the padded /
    # in-kernel-masked path, plus non-trivial tau & loss_weight.
    _run_case(k2, B=2, C_in=32, num_classes=8,
              student_dhw=(8, 7, 7), teacher_dhw=(4, 4, 4),
              tau=2.0, loss_weight=0.5)

    print("KERNEL_OK")
</pallas_src>

<mosaic_0001>
module attributes {stable_mosaic.version = 11 : i64} {
  func.func @_dsd_loss_kernel(%arg0: i32, %arg1: i32, %arg2: memref<1x32x512xf32, #tpu.memory_space<vmem>>, %arg3: memref<1x8x512xf32, #tpu.memory_space<vmem>>, %arg4: memref<1x1x512xi32, #tpu.memory_space<vmem>>, %arg5: memref<8x32xbf16, #tpu.memory_space<vmem>>, %arg6: memref<8x1xf32, #tpu.memory_space<vmem>>, %arg7: memref<1x1x512xf32, #tpu.memory_space<vmem>>) attributes {dimension_semantics = [#tpu.dimension_semantics<parallel>, #tpu.dimension_semantics<parallel>], iteration_bounds = array<i64: 2, 1>, scalar_prefetch = 0 : i64, scratch_operands = 0 : i64, tpu.core_type = #tpu.core_type<tc>, window_params = [{transform_indices = @transform_0, window_bounds = array<i64: 1, 32, 512>}, {transform_indices = @transform_1, window_bounds = array<i64: 1, 8, 512>}, {transform_indices = @transform_2, window_bounds = array<i64: 1, 1, 512>}, {pipeline_mode = #tpu.pipeline_mode<synchronous>, transform_indices = @transform_3, window_bounds = array<i64: 8, 32>}, {pipeline_mode = #tpu.pipeline_mode<synchronous>, transform_indices = @transform_4, window_bounds = array<i64: 8, 1>}, {transform_indices = @transform_5, window_bounds = array<i64: 1, 1, 512>}]} {
    %c0 = arith.constant 0 : index
    %c0_0 = arith.constant 0 : index
    %c0_1 = arith.constant 0 : index
    %0 = vector.load %arg2[%c0, %c0_0, %c0_1] : memref<1x32x512xf32, #tpu.memory_space<vmem>>, vector<1x32x512xf32>
    %1 = vector.shape_cast %0 : vector<1x32x512xf32> to vector<32x512xf32>
    %2 = arith.truncf %1 : vector<32x512xf32> to vector<32x512xbf16>
    %c0_2 = arith.constant 0 : index
    %c0_3 = arith.constant 0 : index
    %3 = vector.load %arg5[%c0_2, %c0_3] : memref<8x32xbf16, #tpu.memory_space<vmem>>, vector<8x32xbf16>
    %cst = arith.constant dense<0.000000e+00> : vector<8x512xf32>
    %4 = tpu.matmul %3, %2, %cst {dimension_numbers = #tpu.dot_dimension_numbers<[1], [0], [0], [1], [0, 0, 1, 1], [], []>} : vector<8x32xbf16>, vector<32x512xbf16>, vector<8x512xf32> -> vector<8x512xf32>
    %c0_4 = arith.constant 0 : index
    %c0_5 = arith.constant 0 : index
    %5 = vector.load %arg6[%c0_4, %c0_5] : memref<8x1xf32, #tpu.memory_space<vmem>>, vector<8x1xf32>
    %6 = vector.broadcast %5 : vector<8x1xf32> to vector<8x512xf32>
    %7 = arith.addf %4, %6 : vector<8x512xf32>
    %c0_6 = arith.constant 0 : index
    %c0_7 = arith.constant 0 : index
    %c0_8 = arith.constant 0 : index
    %8 = vector.load %arg4[%c0_6, %c0_7, %c0_8] : memref<1x1x512xi32, #tpu.memory_space<vmem>>, vector<1x1x512xi32>
    %9 = vector.shape_cast %8 : vector<1x1x512xi32> to vector<1x512xi32>
    %10 = tpu.iota {dimensions = array<i32: 0>} : vector<8x512xi32>
    %11 = vector.broadcast %9 : vector<1x512xi32> to vector<8x512xi32>
    %12 = arith.cmpi eq, %10, %11 : vector<8x512xi32>
    %cst_9 = arith.constant 1.000000e+03 : f32
    %cst_10 = arith.constant 0.000000e+00 : f32
    %13 = vector.broadcast %cst_9 : f32 to vector<8x512xf32>
    %14 = vector.broadcast %cst_10 : f32 to vector<8x512xf32>
    %15 = arith.select %12, %13, %14 : vector<8x512xi1>, vector<8x512xf32>
    %cst_11 = arith.constant 1.000000e+00 : f32
    %16 = vector.broadcast %cst_11 : f32 to vector<8x512xf32>
    %17 = arith.mulf %7, %16 : vector<8x512xf32>
    %18 = arith.subf %17, %15 : vector<8x512xf32>
    %c0_12 = arith.constant 0 : index
    %c0_13 = arith.constant 0 : index
    %c0_14 = arith.constant 0 : index
    %19 = vector.load %arg3[%c0_12, %c0_13, %c0_14] : memref<1x8x512xf32, #tpu.memory_space<vmem>>, vector<1x8x512xf32>
    %20 = vector.shape_cast %19 : vector<1x8x512xf32> to vector<8x512xf32>
    %cst_15 = arith.constant 1.000000e+00 : f32
    %21 = vector.broadcast %cst_15 : f32 to vector<8x512xf32>
    %22 = arith.mulf %20, %21 : vector<8x512xf32>
    %23 = arith.subf %22, %15 : vector<8x512xf32>
    %cst_16 = arith.constant dense<0xFF800000> : vector<512xf32>
    %24 = vector.multi_reduction <maximumf>, %18, %cst_16 [0] : vector<8x512xf32> to vector<512xf32>
    %25 = vector.shape_cast %24 : vector<512xf32> to vector<1x512xf32>
    %26 = vector.broadcast %25 : vector<1x512xf32> to vector<8x512xf32>
    %27 = arith.subf %18, %26 : vector<8x512xf32>
    %28 = math.exp %27 : vector<8x512xf32>
    %cst_17 = arith.constant dense<0.000000e+00> : vector<512xf32>
    %29 = vector.multi_reduction <add>, %28, %cst_17 [0] : vector<8x512xf32> to vector<512xf32>
    %30 = vector.shape_cast %29 : vector<512xf32> to vector<1x512xf32>
    %31 = math.log %30 : vector<1x512xf32>
    %32 = arith.addf %31, %25 : vector<1x512xf32>
    %33 = vector.broadcast %32 : vector<1x512xf32> to vector<8x512xf32>
    %34 = arith.subf %18, %33 : vector<8x512xf32>
    %cst_18 = arith.constant dense<0xFF800000> : vector<512xf32>
    %35 = vector.multi_reduction <maximumf>, %23, %cst_18 [0] : vector<8x512xf32> to vector<512xf32>
    %36 = vector.shape_cast %35 : vector<512xf32> to vector<1x512xf32>
    %37 = vector.broadcast %36 : vector<1x512xf32> to vector<8x512xf32>
    %38 = arith.subf %23, %37 : vector<8x512xf32>
    %39 = math.exp %38 : vector<8x512xf32>
    %cst_19 = arith.constant dense<0.000000e+00> : vector<512xf32>
    %40 = vector.multi_reduction <add>, %39, %cst_19 [0] : vector<8x512xf32> to vector<512xf32>
    %41 = vector.shape_cast %40 : vector<512xf32> to vector<1x512xf32>
    %42 = math.log %41 : vector<1x512xf32>
    %43 = vector.broadcast %42 : vector<1x512xf32> to vector<8x512xf32>
    %44 = arith.subf %38, %43 : vector<8x512xf32>
    %45 = vector.broadcast %41 : vector<1x512xf32> to vector<8x512xf32>
    %46 = arith.divf %39, %45 : vector<8x512xf32>
    %47 = arith.subf %44, %34 : vector<8x512xf32>
    %48 = arith.mulf %46, %47 : vector<8x512xf32>
    %cst_20 = arith.constant dense<0.000000e+00> : vector<512xf32>
    %49 = vector.multi_reduction <add>, %48, %cst_20 [0] : vector<8x512xf32> to vector<512xf32>
    %50 = vector.shape_cast %49 : vector<512xf32> to vector<1x512xf32>
    %c0_21 = arith.constant 0 : index
    %c0_22 = arith.constant 0 : index
    %c0_23 = arith.constant 0 : index
    %51 = vector.load %arg7[%c0_21, %c0_22, %c0_23] : memref<1x1x512xf32, #tpu.memory_space<vmem>>, vector<1x1x512xf32>
    %52 = vector.shape_cast %51 : vector<1x1x512xf32> to vector<1x512xf32>
    %53 = vector.shape_cast %50 : vector<1x512xf32> to vector<1x1x512xf32>
    tpu.vector_store %arg7[%c0_21, %c0_22, %c0_23], %53 {strides = array<i32>} : memref<1x1x512xf32, #tpu.memory_space<vmem>>, vector<1x1x512xf32>,
    return
  }
  func.func @transform_0(%arg0: i32, %arg1: i32) -> (i32, i32, i32) {
    %c0_i32 = arith.constant 0 : i32
    %c0_i32_0 = arith.constant 0 : i32
    return %arg0, %c0_i32, %arg1 : i32, i32, i32
  }
  func.func @transform_1(%arg0: i32, %arg1: i32) -> (i32, i32, i32) {
    %c0_i32 = arith.constant 0 : i32
    %c0_i32_0 = arith.constant 0 : i32
    return %arg0, %c0_i32, %arg1 : i32, i32, i32
  }
  func.func @transform_2(%arg0: i32, %arg1: i32) -> (i32, i32, i32) {
    %c0_i32 = arith.constant 0 : i32
    %c0_i32_0 = arith.constant 0 : i32
    return %arg0, %c0_i32, %arg1 : i32, i32, i32
  }
  func.func @transform_3(%arg0: i32, %arg1: i32) -> (i32, i32) {
    %c0_i32 = arith.constant 0 : i32
    %c0_i32_0 = arith.constant 0 : i32
    %c0_i32_1 = arith.constant 0 : i32
    return %c0_i32, %c0_i32_0 : i32, i32
  }
  func.func @transform_4(%arg0: i32, %arg1: i32) -> (i32, i32) {
    %c0_i32 = arith.constant 0 : i32
    %c0_i32_0 = arith.constant 0 : i32
    %c0_i32_1 = arith.constant 0 : i32
    return %c0_i32, %c0_i32_0 : i32, i32
  }
  func.func @transform_5(%arg0: i32, %arg1: i32) -> (i32, i32, i32) {
    %c0_i32 = arith.constant 0 : i32
    %c0_i32_0 = arith.constant 0 : i32
    return %arg0, %c0_i32, %arg1 : i32, i32, i32
  }
}

</mosaic_0001>

<llo_original>
// kernel: tpu_custom_call.1
$region0: #{tpu_custom_call.1}
  #allocation0 [shape = 'u32[]', space=smem, size = 0x4, offset = 0x4, fixed_abs, tag = 'smem constant byte address 0x4 - core index']
  #allocation1 [shape = 'u32[144,128]{1,0:T(1,128)}', space=vmem, size = 0x12000, scoped, tag = 'internal scratch']
  %s0 = inlined_call_operand.hbm [shape: f32[2,32,512], index: 0, kind: input, shape index: {}]
  %s1 = inlined_call_operand.hbm [shape: f32[2,8,512], index: 1, kind: input, shape index: {}]
  %s2 = inlined_call_operand.vmem [shape: s32[2,1,512], index: 2, kind: input, shape index: {}]
  %s3 = inlined_call_operand.vmem [shape: bf16[8,32], index: 3, kind: input, shape index: {}]
  %s4 = inlined_call_operand.vmem [shape: f32[8,1], index: 4, kind: input, shape index: {}]
  %s5 = inlined_call_operand.hbm [shape: f32[2,1,512], index: 5, kind: output, shape index: {}]
  %s6 = sld [smem:[#allocation0]]
  $region61: #{tpu_custom_call.1} parent=0
    _
  %s8 = ssub.s32 1, %s6
  %s9 = scalar_select 0, %s8, %s6
  $region1: #{tpu_custom_call.1} parent=0
    #allocation2 [shape = 'u8[131072]{0}', space=vmem, size = 0x20000, scoped, tag = 'input window, operand 0']
    #allocation3 [shape = 's32[2]{0}', space=sflag, size = 0x8, scoped, tag = 'scoped memory for tpu_custom_call.1']
    #allocation4 [shape = 's32[2]{0}', space=sflag, size = 0x8, scoped, tag = 'scoped memory for tpu_custom_call.1']
    #allocation5 [shape = 'u8[32768]{0}', space=vmem, size = 0x8000, scoped, tag = 'input window, operand 1']
    #allocation6 [shape = 's32[2]{0}', space=sflag, size = 0x8, scoped, tag = 'scoped memory for tpu_custom_call.1']
    #allocation7 [shape = 'u8[4096]{0}', space=vmem, size = 0x1000, scoped, tag = 'output window, operand 0']
    %10 = vsyncpa [#allocation3], 0
    %s11 = scalar_lea.sflag [#allocation3], 1
    %12 = vsyncpa %s11, 0
    %13 = vsyncpa [#allocation6], 0
    %s14 = scalar_lea.sflag [#allocation6], 1
    %15 = vsyncpa %s14, 0
    %16 = vsyncpa [#allocation4], 0
    %s17 = scalar_lea.sflag [#allocation4], 1
    %18 = vsyncpa %s17, 0
    loop: start=0, step=1, limit=4
    $region2: #{tpu_custom_call.1} parent=1 // loop_pre_header
      _
    $region3: #{tpu_custom_call.1} parent=1 // loop_header
      %s20 = sphi 0, %s24
      %p21 = scmp.ge.s32.totalorder %s20, 4
      %s27 = sphi 0, %s39
      %s28 = sphi 0, %s35
      %s29 = sphi 0, %s27
      %s30 = sphi 0, %s28
      %s31 = sphi 0, %s29
      %s32 = sphi 0, %s30
      %s44 = sphi 0, %s46
      %s47 = sphi 0, %s44
      %s48 = sphi 0, %s47
      %s64 = sphi 0, %s48
      %s72 = sphi 0, %s74
      %s75 = sphi 0, %s72
      %s76 = sphi 0, %s75
      %s92 = sphi 0, %s76
      %s100 = sphi 0, %s102
      %s103 = sphi 0, %s100
      %s104 = sphi 0, %s103
      %s120 = sphi 0, %s104
      %s124 = sphi 0, %s124
      %s126 = sphi 0, %s124
      %s127 = sphi 0, %s126
      %s141 = sphi 0, %s127
      %s145 = sphi 0, %s145
      %s147 = sphi 0, %s145
      %s148 = sphi 0, %s147
      %s162 = sphi 0, %s148
      %s170 = sphi 0, %s172
      %s173 = sphi 0, %s170
      %s174 = sphi 0, %s173
      %s190 = sphi 0, %s174
    $region4: #{tpu_custom_call.1} parent=1 // loop_header_branch
      %23 = sbr.rel (%p21) target = $region8
    $region5: #{tpu_custom_call.1} parent=1 // loop_body
      %s25 = ssub.s32 %s20, 1
      %s26 = ssub.s32 %s20, 2
      %s33 = sadd.s32 1, %s28
      %p34 = scmp.ge.s32.totalorder %s33, 1
      %s35 = scalar_select %p34, 0, %s33
      %s36 = sadd.s32 1, %s27
      %s37 = scalar_select %p34, %s36, %s27
      %p38 = scmp.ge.s32.totalorder %s37, 2
      %s39 = scalar_select %p38, 0, %s37
      %s40 = ssub.s32 %s27, %s39
      %s41 = ssub.s32 %s28, %s35
      %s42 = sor.u32 %s40, %s41
      %p43 = scmp.eq.s32.totalorder %s42, 0
      %s45 = sadd.s32 %s44, 1
      %s46 = scalar_select %p43, %s44, %s45
      %p49 = pneg %p43
      %p50 = scmp.eq.s32.totalorder %s20, 1
      %p51 = por %p49, %p50
      %p52 = scmp.ne.s32.totalorder %s44, %s47
      %p53 = scmp.eq.s32.totalorder %s20, 0
      %p54 = por %p52, %p53
      %p55 = scmp.ne.s32.totalorder %s44, %s47
      %p56 = scmp.eq.s32.totalorder %s25, 1
      %p57 = por %p55, %p56
      %p58 = scmp.ne.s32.totalorder %s47, %s48
      %p59 = scmp.eq.s32.totalorder %s25, 0
      %p60 = por %p58, %p59
      %p61 = scmp.ne.s32.totalorder %s47, %s48
      %p62 = scmp.eq.s32.totalorder %s26, 1
      %p63 = por %p61, %p62
      %p65 = scmp.ne.s32.totalorder %s48, %s64
      %p66 = scmp.eq.s32.totalorder %s26, 0
      %p67 = por %p65, %p66
      %s68 = ssub.s32 %s27, %s39
      %s69 = ssub.s32 %s28, %s35
      %s70 = sor.u32 %s68, %s69
      %p71 = scmp.eq.s32.totalorder %s70, 0
      %s73 = sadd.s32 %s72, 1
      %s74 = scalar_select %p71, %s72, %s73
      %p77 = pneg %p71
      %p78 = scmp.eq.s32.totalorder %s20, 1
      %p79 = por %p77, %p78
      %p80 = scmp.ne.s32.totalorder %s72, %s75
      %p81 = scmp.eq.s32.totalorder %s20, 0
      %p82 = por %p80, %p81
      %p83 = scmp.ne.s32.totalorder %s72, %s75
      %p84 = scmp.eq.s32.totalorder %s25, 1
      %p85 = por %p83, %p84
      %p86 = scmp.ne.s32.totalorder %s75, %s76
      %p87 = scmp.eq.s32.totalorder %s25, 0
      %p88 = por %p86, %p87
      %p89 = scmp.ne.s32.totalorder %s75, %s76
      %p90 = scmp.eq.s32.totalorder %s26, 1
      %p91 = por %p89, %p90
      %p93 = scmp.ne.s32.totalorder %s76, %s92
      %p94 = scmp.eq.s32.totalorder %s26, 0
      %p95 = por %p93, %p94
      %s96 = ssub.s32 %s27, %s39
      %s97 = ssub.s32 %s28, %s35
      %s98 = sor.u32 %s96, %s97
      %p99 = scmp.eq.s32.totalorder %s98, 0
      %s101 = sadd.s32 %s100, 1
      %s102 = scalar_select %p99, %s100, %s101
      %p105 = pneg %p99
      %p106 = scmp.eq.s32.totalorder %s20, 1
      %p107 = por %p105, %p106
      %p108 = scmp.ne.s32.totalorder %s100, %s103
      %p109 = scmp.eq.s32.totalorder %s20, 0
      %p110 = por %p108, %p109
      %p111 = scmp.ne.s32.totalorder %s100, %s103
      %p112 = scmp.eq.s32.totalorder %s25, 1
      %p113 = por %p111, %p112
      %p114 = scmp.ne.s32.totalorder %s103, %s104
      %p115 = scmp.eq.s32.totalorder %s25, 0
      %p116 = por %p114, %p115
      %p117 = scmp.ne.s32.totalorder %s103, %s104
      %p118 = scmp.eq.s32.totalorder %s26, 1
      %p119 = por %p117, %p118
      %p121 = scmp.ne.s32.totalorder %s104, %s120
      %p122 = scmp.eq.s32.totalorder %s26, 0
      %p123 = por %p121, %p122
      %s125 = sadd.s32 %s124, 1
      %p128 = scmp.eq.s32.totalorder %s20, 1
      %p129 = scmp.ne.s32.totalorder %s124, %s126
      %p130 = scmp.eq.s32.totalorder %s20, 0
      %p131 = por %p129, %p130
      %p132 = scmp.ne.s32.totalorder %s124, %s126
      %p133 = scmp.eq.s32.totalorder %s25, 1
      %p134 = por %p132, %p133
      %p135 = scmp.ne.s32.totalorder %s126, %s127
      %p136 = scmp.eq.s32.totalorder %s25, 0
      %p137 = por %p135, %p136
      %p138 = scmp.ne.s32.totalorder %s126, %s127
      %p139 = scmp.eq.s32.totalorder %s26, 1
      %p140 = por %p138, %p139
      %p142 = scmp.ne.s32.totalorder %s127, %s141
      %p143 = scmp.eq.s32.totalorder %s26, 0
      %p144 = por %p142, %p143
      %s146 = sadd.s32 %s145, 1
      %p149 = scmp.eq.s32.totalorder %s20, 1
      %p150 = scmp.ne.s32.totalorder %s145, %s147
      %p151 = scmp.eq.s32.totalorder %s20, 0
      %p152 = por %p150, %p151
      %p153 = scmp.ne.s32.totalorder %s145, %s147
      %p154 = scmp.eq.s32.totalorder %s25, 1
      %p155 = por %p153, %p154
      %p156 = scmp.ne.s32.totalorder %s147, %s148
      %p157 = scmp.eq.s32.totalorder %s25, 0
      %p158 = por %p156, %p157
      %p159 = scmp.ne.s32.totalorder %s147, %s148
      %p160 = scmp.eq.s32.totalorder %s26, 1
      %p161 = por %p159, %p160
      %p163 = scmp.ne.s32.totalorder %s148, %s162
      %p164 = scmp.eq.s32.totalorder %s26, 0
      %p165 = por %p163, %p164
      %s166 = ssub.s32 %s27, %s39
      %s167 = ssub.s32 %s28, %s35
      %s168 = sor.u32 %s166, %s167
      %p169 = scmp.eq.s32.totalorder %s168, 0
      %s171 = sadd.s32 %s170, 1
      %s172 = scalar_select %p169, %s170, %s171
      %p175 = pneg %p169
      %p176 = scmp.eq.s32.totalorder %s20, 1
      %p177 = por %p175, %p176
      %p178 = scmp.ne.s32.totalorder %s170, %s173
      %p179 = scmp.eq.s32.totalorder %s20, 0
      %p180 = por %p178, %p179
      %p181 = scmp.ne.s32.totalorder %s170, %s173
      %p182 = scmp.eq.s32.totalorder %s25, 1
      %p183 = por %p181, %p182
      %p184 = scmp.ne.s32.totalorder %s173, %s174
      %p185 = scmp.eq.s32.totalorder %s25, 0
      %p186 = por %p184, %p185
      %p187 = scmp.ne.s32.totalorder %s173, %s174
      %p188 = scmp.eq.s32.totalorder %s26, 1
      %p189 = por %p187, %p188
      %p191 = scmp.ne.s32.totalorder %s174, %s190
      %p192 = scmp.eq.s32.totalorder %s26, 0
      %p193 = por %p191, %p192
      %p194 = scmp.le.s32.totalorder 1, %s20
      %p195 = scmp.lt.s32.totalorder %s20, 3
      %p196 = pnand %p194, %p195
      %p197 = pneg %p196
      // Predicated region
      $region9: #{tpu_custom_call.1} parent=5 // pred_check
        _
      $region10: #{tpu_custom_call.1} parent=5 // pred_check_branch
        %199 = sbr.rel (%p196) target = $region12
      $region11: #{tpu_custom_call.1} parent=5 // pred_region
        %s200 = ssub.s32 %s20, 1
        // Predicated region
        $region13: #{tpu_custom_call.1} parent=11 // pred_check
          %p201 = pneg %p137
        $region14: #{tpu_custom_call.1} parent=11 // pred_check_branch
          %203 = sbr.rel (%p201) target = $region16
        $region15: #{tpu_custom_call.1} parent=11 // pred_region
          _
        $region16: #{tpu_custom_call.1} parent=11 // pred_fallthru
          _
        // Predicated region
        $region17: #{tpu_custom_call.1} parent=11 // pred_check
          %p204 = pneg %p158
        $region18: #{tpu_custom_call.1} parent=11 // pred_check_branch
          %206 = sbr.rel (%p204) target = $region20
        $region19: #{tpu_custom_call.1} parent=11 // pred_region
          _
        $region20: #{tpu_custom_call.1} parent=11 // pred_fallthru
          _
      $region12: #{tpu_custom_call.1} parent=5 // pred_fallthru
        _
      %p207 = scmp.lt.s32.totalorder %s20, 2
      // Predicated region
      $region21: #{tpu_custom_call.1} parent=5 // pred_check
        %p208 = pneg %p207
      $region22: #{tpu_custom_call.1} parent=5 // pred_check_branch
        %210 = sbr.rel (%p208) target = $region24
      $region23: #{tpu_custom_call.1} parent=5 // pred_region
        // Predicated region
        $region25: #{tpu_custom_call.1} parent=23 // pred_check
          %p211 = pneg %p54
        $region26: #{tpu_custom_call.1} parent=23 // pred_check_branch
          %213 = sbr.rel (%p211) target = $region28
        $region27: #{tpu_custom_call.1} parent=23 // pred_region
          %s214 = sand.u32 %s44, 1
          %s215 = scalar_lea.sflag [#allocation3], %s214
          %s216 = sand.u32 %s44, 1
          %s217 = smul.addr %s216, 128
          %s218 = scalar_lea.vmem [#allocation2], %s217
          %s219 = smul.u32 4, %s28
          %s221 = ssub.s32 2048, 2048
          %222 = vsyncadd %s215, %s221
          %s223 = smul.addr %s27, 16
          %s224 = sadd.s32 %s219, %s223
          %s225 = smul.addr %s224, 128
          %s226 = scalar_lea.hbm %s0, %s225
          %s227 = sshll.u32 %s218, 4
          %s228 = int_to_ptr.vmem [resolvable:$true] %s227
          %233 = dma.hbm_to_vmem [thread:$0]  %s226, 2048, %s228, %s215, 512, 512, 32
        $region28: #{tpu_custom_call.1} parent=23 // pred_fallthru
          _
        // Predicated region
        $region29: #{tpu_custom_call.1} parent=23 // pred_check
          %p234 = pneg %p82
        $region30: #{tpu_custom_call.1} parent=23 // pred_check_branch
          %236 = sbr.rel (%p234) target = $region32
        $region31: #{tpu_custom_call.1} parent=23 // pred_region
          %s237 = sand.u32 %s72, 1
          %s238 = scalar_lea.sflag [#allocation6], %s237
          %s239 = sand.u32 %s72, 1
          %s240 = smul.addr %s239, 32
          %s241 = scalar_lea.vmem [#allocation5], %s240
          %s242 = smul.u32 4, %s28
          %s244 = ssub.s32 512, 512
          %245 = vsyncadd %s238, %s244
          %s246 = smul.addr %s27, 4
          %s247 = sadd.s32 %s242, %s246
          %s248 = smul.addr %s247, 128
          %s249 = scalar_lea.hbm %s1, %s248
          %s251 = sshll.u32 %s241, 4
          %s252 = int_to_ptr.vmem [resolvable:$true] %s251
          %254 = dma.hbm_to_vmem [thread:$0]  %s249, 512, %s252, %s238
        $region32: #{tpu_custom_call.1} parent=23 // pred_fallthru
          _
        // Predicated region
        $region33: #{tpu_custom_call.1} parent=23 // pred_check
          %p255 = pneg %p110
        $region34: #{tpu_custom_call.1} parent=23 // pred_check_branch
          %257 = sbr.rel (%p255) target = $region36
        $region35: #{tpu_custom_call.1} parent=23 // pred_region
          %s258 = smul.u32 4, %s28
          %p259 = scmp.lt.s32.totalorder %s27, 1
          %s260 = scalar_select %p259, %s27, 1
          %p261 = scmp.lt.s32.totalorder %s258, 3
          %s262 = scalar_select %p261, %s258, 3
          %s263 = smul.addr %s260, 4
          %s264 = sadd.s32 %s262, %s263
          %s265 = scalar_lea.vmem %s2, %s264
          %s266 = smul.u32 4, %s28
        $region36: #{tpu_custom_call.1} parent=23 // pred_fallthru
          _
      $region24: #{tpu_custom_call.1} parent=5 // pred_fallthru
        _
      %p267 = scmp.le.s32.totalorder 1, %s20
      %p268 = scmp.lt.s32.totalorder %s20, 3
      %p269 = pnand %p267, %p268
      %p270 = pneg %p269
      // Predicated region
      $region37: #{tpu_custom_call.1} parent=5 // pred_check
        _
      $region38: #{tpu_custom_call.1} parent=5 // pred_check_branch
        %272 = sbr.rel (%p269) target = $region40
      $region39: #{tpu_custom_call.1} parent=5 // pred_region
        %s273 = ssub.s32 %s20, 1
        %s274 = sand.u32 %s47, 1
        %s275 = scalar_lea.sflag [#allocation3], %s274
        %s276 = sand.u32 %s47, 1
        %s277 = smul.addr %s276, 128
        %s278 = scalar_lea.vmem [#allocation2], %s277
        // Predicated region
        $region41: #{tpu_custom_call.1} parent=39 // pred_check
          %p279 = pneg %p60
        $region42: #{tpu_custom_call.1} parent=39 // pred_check_branch
          %281 = sbr.rel (%p279) target = $region44
        $region43: #{tpu_custom_call.1} parent=39 // pred_region
          %282 = dma.done %s275, 2048
        $region44: #{tpu_custom_call.1} parent=39 // pred_fallthru
          _
        %s283 = sand.u32 %s75, 1
        %s284 = scalar_lea.sflag [#allocation6], %s283
        %s285 = sand.u32 %s75, 1
        %s286 = smul.addr %s285, 32
        %s287 = scalar_lea.vmem [#allocation5], %s286
        // Predicated region
        $region45: #{tpu_custom_call.1} parent=39 // pred_check
          %p288 = pneg %p88
        $region46: #{tpu_custom_call.1} parent=39 // pred_check_branch
          %290 = sbr.rel (%p288) target = $region48
        $region47: #{tpu_custom_call.1} parent=39 // pred_region
          %291 = dma.done %s284, 512
        $region48: #{tpu_custom_call.1} parent=39 // pred_fallthru
          _
        %s292 = sand.u32 %s47, 1
        %s293 = scalar_lea.sflag [#allocation3], %s292
        %s294 = sand.u32 %s47, 1
        %s295 = smul.addr %s294, 128
        %s296 = scalar_lea.vmem [#allocation2], %s295
        %p297 = pneg %p60
        %p298 = pneg %p57
        %s299 = sand.u32 %s75, 1
        %s300 = scalar_lea.sflag [#allocation6], %s299
        %s301 = sand.u32 %s75, 1
        %s302 = smul.addr %s301, 32
        %s303 = scalar_lea.vmem [#allocation5], %s302
        %p304 = pneg %p88
        %p305 = pneg %p85
        %s306 = smul.u32 4, %s30
        %p307 = scmp.lt.s32.totalorder %s29, 1
        %s308 = scalar_select %p307, %s29, 1
        %p309 = scmp.lt.s32.totalorder %s306, 3
        %s310 = scalar_select %p309, %s306, 3
        %s311 = smul.addr %s308, 4
        %s312 = sadd.s32 %s310, %s311
        %s313 = scalar_lea.vmem %s2, %s312
        %p314 = pneg %p116
        %p315 = pneg %p113
        %p316 = pneg %p137
        %p317 = pneg %p134
        %p318 = pneg %p158
        %p319 = pneg %p155
        %p320 = pneg %p186
        %p321 = pneg %p183
        %s322 = sand.u32 %s173, 1
        %s323 = scalar_lea.sflag [#allocation4], %s322
        %s324 = sand.u32 %s173, 1
        %s325 = smul.addr %s324, 4
        %s326 = scalar_lea.vmem [#allocation7], %s325
        %s327 = smul.u32 4, %s30
        %s328 = smul.u32 4, %s30
        %s329 = smul.u32 4, %s30
        %p330 = scmp.lt.s32.totalorder %s29, 1
        %s331 = scalar_select %p330, %s29, 1
        %p332 = scmp.lt.s32.totalorder %s329, 3
        %s333 = scalar_select %p332, %s329, 3
        %s334 = smul.addr %s331, 4
        %s335 = sadd.s32 %s333, %s334
        %s336 = scalar_lea.vmem %s2, %s335
        %s337 = smul.u32 4, %s30
        %s338 = smul.u32 4, %s30
        %v340 = vld [vmem:[%s278] sm:$0xff]
        %v341 = vld [vmem:[%s278 + $0x8] sm:$0xff]
        %v342 = vld [vmem:[%s278 + $0x10] sm:$0xff]
        %v343 = vld [vmem:[%s278 + $0x18] sm:$0xff]
        %v344 = vld [vmem:[%s278 + $0x20] sm:$0xff]
        %v345 = vld [vmem:[%s278 + $0x28] sm:$0xff]
        %v346 = vld [vmem:[%s278 + $0x30] sm:$0xff]
        %v347 = vld [vmem:[%s278 + $0x38] sm:$0xff]
        %v348 = vld [vmem:[%s278 + $0x40] sm:$0xff]
        %v349 = vld [vmem:[%s278 + $0x48] sm:$0xff]
        %v350 = vld [vmem:[%s278 + $0x50] sm:$0xff]
        %v351 = vld [vmem:[%s278 + $0x58] sm:$0xff]
        %v352 = vld [vmem:[%s278 + $0x60] sm:$0xff]
        %v353 = vld [vmem:[%s278 + $0x68] sm:$0xff]
        %v354 = vld [vmem:[%s278 + $0x70] sm:$0xff]
        %v355 = vld [vmem:[%s278 + $0x78] sm:$0xff]
        %v356 = vpack.c.bf16 %v344, %v340
        %v357 = vpack.c.bf16 %v345, %v341
        %v358 = vpack.c.bf16 %v346, %v342
        %v359 = vpack.c.bf16 %v347, %v343
        %v360 = vpack.c.bf16 %v352, %v348
        %v361 = vpack.c.bf16 %v353, %v349
        %v362 = vpack.c.bf16 %v354, %v350
        %v363 = vpack.c.bf16 %v355, %v351
        %v364 = vld [vmem:[%s3] sm:$0xf]
        %v365 = vld [vmem:[%s4] sm:$0xff]
        %367 = vset.pattern.permute.xlu0 0
        %368 = vperm.xlu0 %367, %v365
        %v369 = vpop.permute.xlu0 %368
        %vm371 = vcmask 261120
        %v373 = vsel %vm371, %v364, 0
        %375 = vmatprep.subr.bf16.mxu0 0
        %376 = vmatpush1.bf16.msra.mxu0 0
        %377 = vmatprep.subr.bf16.mxu0 0
        %378 = vmatpush1.bf16.msra.mxu0 0
        %379 = vmatprep.subr.bf16.mxu0 0
        %380 = vmatpush1.bf16.msra.mxu0 0
        %381 = vmatprep.subr.bf16.mxu0 0
        %382 = vmatpush1.bf16.msra.mxu0 0
        %383 = vmatprep.subr.bf16.mxu0 0
        %384 = vmatpush1.bf16.msra.mxu0 0
        %385 = vmatprep.subr.bf16.mxu0 0
        %386 = vmatpush1.bf16.msra.mxu0 0
        %387 = vmatprep.subr.bf16.mxu0 %v361
        %388 = vmatpush1.bf16.msra.mxu0 %v360
        %389 = vmatprep.subr.bf16.mxu0 %v357
        %390 = vmatpush1.bf16.msra.mxu0 %v356
        %391 = vmatprep.subr.bf16.mxu0 0
        %392 = vmatpush2.bf16.msra.mxu0 0
        %393 = vmatprep.subr.bf16.mxu0 0
        %394 = vmatpush2.bf16.msra.mxu0 0
        %395 = vmatprep.subr.bf16.mxu0 0
        %396 = vmatpush2.bf16.msra.mxu0 0
        %397 = vmatprep.subr.bf16.mxu0 0
        %398 = vmatpush2.bf16.msra.mxu0 0
        %399 = vmatprep.subr.bf16.mxu0 0
        %400 = vmatpush2.bf16.msra.mxu0 0
        %401 = vmatprep.subr.bf16.mxu0 0
        %402 = vmatpush2.bf16.msra.mxu0 0
        %403 = vmatprep.subr.bf16.mxu0 0
        %404 = vmatpush2.bf16.msra.mxu0 0
        %405 = vmatprep.subr.bf16.mxu0 0
        %406 = vmatpush2.bf16.msra.mxu0 0
        %407 = vmatprep.mubr.bf16.mxu0 0
        %408 = vmatmul.mubr.bf16.gmra.mxu0 %v373
        %v409 = vpop.f32.mrf.mxu0
        %v410 = vadd.f32 %v369, %v409
        %v411 = vpop.f32.mrf.mxu0
        %v412 = vadd.f32 %v369, %v411
        %v413 = vpop.f32.mrf.mxu0
        %v414 = vpop.f32.mrf.mxu0
        %415 = vdwg.mxu0
        %416 = vmatprep.subr.bf16.mxu0 0
        %417 = vmatpush1.bf16.msra.mxu0 0
        %418 = vmatprep.subr.bf16.mxu0 0
        %419 = vmatpush1.bf16.msra.mxu0 0
        %420 = vmatprep.subr.bf16.mxu0 0
        %421 = vmatpush1.bf16.msra.mxu0 0
        %422 = vmatprep.subr.bf16.mxu0 0
        %423 = vmatpush1.bf16.msra.mxu0 0
        %424 = vmatprep.subr.bf16.mxu0 0
        %425 = vmatpush1.bf16.msra.mxu0 0
        %426 = vmatprep.subr.bf16.mxu0 0
        %427 = vmatpush1.bf16.msra.mxu0 0
        %428 = vmatprep.subr.bf16.mxu0 %v363
        %429 = vmatpush1.bf16.msra.mxu0 %v362
        %430 = vmatprep.subr.bf16.mxu0 %v359
        %431 = vmatpush1.bf16.msra.mxu0 %v358
        %432 = vmatprep.subr.bf16.mxu0 0
        %433 = vmatpush2.bf16.msra.mxu0 0
        %434 = vmatprep.subr.bf16.mxu0 0
        %435 = vmatpush2.bf16.msra.mxu0 0
        %436 = vmatprep.subr.bf16.mxu0 0
        %437 = vmatpush2.bf16.msra.mxu0 0
        %438 = vmatprep.subr.bf16.mxu0 0
        %439 = vmatpush2.bf16.msra.mxu0 0
        %440 = vmatprep.subr.bf16.mxu0 0
        %441 = vmatpush2.bf16.msra.mxu0 0
        %442 = vmatprep.subr.bf16.mxu0 0
        %443 = vmatpush2.bf16.msra.mxu0 0
        %444 = vmatprep.subr.bf16.mxu0 0
        %445 = vmatpush2.bf16.msra.mxu0 0
        %446 = vmatprep.subr.bf16.mxu0 0
        %447 = vmatpush2.bf16.msra.mxu0 0
        %448 = vmatprep.mubr.bf16.mxu0 0
        %449 = vmatmul.mubr.bf16.gmra.mxu0 %v373
        %v450 = vpop.f32.mrf.mxu0
        %v451 = vadd.f32 %v369, %v450
        %v452 = vpop.f32.mrf.mxu0
        %v453 = vadd.f32 %v369, %v452
        %v454 = vpop.f32.mrf.mxu0
        %v455 = vpop.f32.mrf.mxu0
        %456 = vdwg.mxu0
        %v457 = vld [vmem:[%s336] sm:$0xf]
        %v458 = vlaneseq
        %v459 = vshrl.u32 %v458, 7
        %v460 = vlaneseq
        %v461 = vshrl.u32 %v460, 7
        %v462 = vsub.s32 0, %v461
        %v463 = vrot.slane %v457, %v462
        %v464 = vlaneseq
        %v465 = vshrl.u32 %v464, 7
        %v466 = vsub.s32 1, %v465
        %v467 = vrot.slane %v457, %v466
        %v468 = vlaneseq
        %v469 = vshrl.u32 %v468, 7
        %v470 = vsub.s32 2, %v469
        %v471 = vrot.slane %v457, %v470
        %v472 = vlaneseq
        %v473 = vshrl.u32 %v472, 7
        %v474 = vsub.s32 3, %v473
        %v475 = vrot.slane %v457, %v474
        %vm476 = vcmp.eq.s32.totalorder %v459, %v463
        %vm477 = vcmp.eq.s32.totalorder %v459, %v467
        %vm478 = vcmp.eq.s32.totalorder %v459, %v471
        %vm479 = vcmp.eq.s32.totalorder %v459, %v475
        %v480 = vsel %vm476, 1000.0, 0.0
        %v481 = vsel %vm477, 1000.0, 0.0
        %v482 = vsel %vm478, 1000.0, 0.0
        %v483 = vsel %vm479, 1000.0, 0.0
        %v484 = vsub.f32 %v410, %v480
        %v485 = vsub.f32 %v412, %v481
        %v486 = vsub.f32 %v451, %v482
        %v487 = vsub.f32 %v453, %v483
        %v488 = vld [vmem:[%s287] sm:$0xff]
        %v489 = vld [vmem:[%s287 + $0x8] sm:$0xff]
        %v490 = vld [vmem:[%s287 + $0x10] sm:$0xff]
        %v491 = vld [vmem:[%s287 + $0x18] sm:$0xff]
        %v492 = vsub.f32 %v488, %v480
        %v493 = vsub.f32 %v489, %v481
        %v494 = vsub.f32 %v490, %v482
        %v495 = vsub.f32 %v491, %v483
        %v496 = vrot.slane %v484, 4
        %v497 = vmax.f32 %v484, %v496
        %v498 = vrot.slane %v497, 2
        %v499 = vmax.f32 %v497, %v498
        %v500 = vrot.slane %v499, 1
        %v501 = vmax.f32 %v499, %v500
        %v502 = vrot.slane %v485, 4
        %v503 = vmax.f32 %v485, %v502
        %v504 = vrot.slane %v503, 2
        %v505 = vmax.f32 %v503, %v504
        %v506 = vrot.slane %v505, 1
        %v507 = vmax.f32 %v505, %v506
        %v508 = vrot.slane %v486, 4
        %v509 = vmax.f32 %v486, %v508
        %v510 = vrot.slane %v509, 2
        %v511 = vmax.f32 %v509, %v510
        %v512 = vrot.slane %v511, 1
        %v513 = vmax.f32 %v511, %v512
        %v514 = vrot.slane %v487, 4
        %v515 = vmax.f32 %v487, %v514
        %v516 = vrot.slane %v515, 2
        %v517 = vmax.f32 %v515, %v516
        %v518 = vrot.slane %v517, 1
        %v519 = vmax.f32 %v517, %v518
        %v520 = vsub.f32 %v484, %v501
        %v521 = vsub.f32 %v485, %v507
        %v522 = vsub.f32 %v486, %v513
        %v523 = vsub.f32 %v487, %v519
        %v524 = vmul.f32 %v520, 1.442695
        %v525 = vpow.pop %v524
        %v526 = vmul.f32 %v521, 1.442695
        %v527 = vpow.pop %v526
        %v528 = vmul.f32 %v522, 1.442695
        %v529 = vpow.pop %v528
        %v530 = vmul.f32 %v523, 1.442695
        %v531 = vpow.pop %v530
        %v532 = vrot.slane %v525, 4
        %v533 = vadd.f32 %v525, %v532
        %v534 = vrot.slane %v533, 2
        %v535 = vadd.f32 %v533, %v534
        %v536 = vrot.slane %v535, 1
        %v537 = vadd.f32 %v535, %v536
        %v538 = vrot.slane %v527, 4
        %v539 = vadd.f32 %v527, %v538
        %v540 = vrot.slane %v539, 2
        %v541 = vadd.f32 %v539, %v540
        %v542 = vrot.slane %v541, 1
        %v543 = vadd.f32 %v541, %v542
        %v544 = vrot.slane %v529, 4
        %v545 = vadd.f32 %v529, %v544
        %v546 = vrot.slane %v545, 2
        %v547 = vadd.f32 %v545, %v546
        %v548 = vrot.slane %v547, 1
        %v549 = vadd.f32 %v547, %v548
        %v550 = vrot.slane %v531, 4
        %v551 = vadd.f32 %v531, %v550
        %v552 = vrot.slane %v551, 2
        %v553 = vadd.f32 %v551, %v552
        %v554 = vrot.slane %v553, 1
        %v555 = vadd.f32 %v553, %v554
        %v556 = vlog2.pop %v537
        %v557 = vmul.f32 %v556, 0.6931472
        %v558 = vlog2.pop %v543
        %v559 = vmul.f32 %v558, 0.6931472
        %v560 = vlog2.pop %v549
        %v561 = vmul.f32 %v560, 0.6931472
        %v562 = vlog2.pop %v555
        %v563 = vmul.f32 %v562, 0.6931472
        %v564 = vadd.f32 %v557, %v501
        %v565 = vadd.f32 %v559, %v507
        %v566 = vadd.f32 %v561, %v513
        %v567 = vadd.f32 %v563, %v519
        %v568 = vsub.f32 %v484, %v564
        %v569 = vsub.f32 %v485, %v565
        %v570 = vsub.f32 %v486, %v566
        %v571 = vsub.f32 %v487, %v567
        %v572 = vrot.slane %v492, 4
        %v573 = vmax.f32 %v492, %v572
        %v574 = vrot.slane %v573, 2
        %v575 = vmax.f32 %v573, %v574
        %v576 = vrot.slane %v575, 1
        %v577 = vmax.f32 %v575, %v576
        %v578 = vrot.slane %v493, 4
        %v579 = vmax.f32 %v493, %v578
        %v580 = vrot.slane %v579, 2
        %v581 = vmax.f32 %v579, %v580
        %v582 = vrot.slane %v581, 1
        %v583 = vmax.f32 %v581, %v582
        %v584 = vrot.slane %v494, 4
        %v585 = vmax.f32 %v494, %v584
        %v586 = vrot.slane %v585, 2
        %v587 = vmax.f32 %v585, %v586
        %v588 = vrot.slane %v587, 1
        %v589 = vmax.f32 %v587, %v588
        %v590 = vrot.slane %v495, 4
        %v591 = vmax.f32 %v495, %v590
        %v592 = vrot.slane %v591, 2
        %v593 = vmax.f32 %v591, %v592
        %v594 = vrot.slane %v593, 1
        %v595 = vmax.f32 %v593, %v594
        %v596 = vsub.f32 %v492, %v577
        %v597 = vsub.f32 %v493, %v583
        %v598 = vsub.f32 %v494, %v589
        %v599 = vsub.f32 %v495, %v595
        %v600 = vmul.f32 %v596, 1.442695
        %v601 = vpow.pop %v600
        %v602 = vmul.f32 %v597, 1.442695
        %v603 = vpow.pop %v602
        %v604 = vmul.f32 %v598, 1.442695
        %v605 = vpow.pop %v604
        %v606 = vmul.f32 %v599, 1.442695
        %v607 = vpow.pop %v606
        %v608 = vrot.slane %v601, 4
        %v609 = vadd.f32 %v601, %v608
        %v610 = vrot.slane %v609, 2
        %v611 = vadd.f32 %v609, %v610
        %v612 = vrot.slane %v611, 1
        %v613 = vadd.f32 %v611, %v612
        %v614 = vrot.slane %v603, 4
        %v615 = vadd.f32 %v603, %v614
        %v616 = vrot.slane %v615, 2
        %v617 = vadd.f32 %v615, %v616
        %v618 = vrot.slane %v617, 1
        %v619 = vadd.f32 %v617, %v618
        %v620 = vrot.slane %v605, 4
        %v621 = vadd.f32 %v605, %v620
        %v622 = vrot.slane %v621, 2
        %v623 = vadd.f32 %v621, %v622
        %v624 = vrot.slane %v623, 1
        %v625 = vadd.f32 %v623, %v624
        %v626 = vrot.slane %v607, 4
        %v627 = vadd.f32 %v607, %v626
        %v628 = vrot.slane %v627, 2
        %v629 = vadd.f32 %v627, %v628
        %v630 = vrot.slane %v629, 1
        %v631 = vadd.f32 %v629, %v630
        %v632 = vlog2.pop %v613
        %v633 = vmul.f32 %v632, 0.6931472
        %v634 = vlog2.pop %v619
        %v635 = vmul.f32 %v634, 0.6931472
        %v636 = vlog2.pop %v625
        %v637 = vmul.f32 %v636, 0.6931472
        %v638 = vlog2.pop %v631
        %v639 = vmul.f32 %v638, 0.6931472
        %v640 = vsub.f32 %v596, %v633
        %v641 = vsub.f32 %v597, %v635
        %v642 = vsub.f32 %v598, %v637
        %v643 = vsub.f32 %v599, %v639
        %v644 = vrcp.pop %v613
        %v645 = vmul.f32 %v601, %v644
        %v646 = vrcp.pop %v619
        %v647 = vmul.f32 %v603, %v646
        %v648 = vrcp.pop %v625
        %v649 = vmul.f32 %v605, %v648
        %v650 = vrcp.pop %v631
        %v651 = vmul.f32 %v607, %v650
        %v652 = vsub.f32 %v640, %v568
        %v653 = vsub.f32 %v641, %v569
        %v654 = vsub.f32 %v642, %v570
        %v655 = vsub.f32 %v643, %v571
        %v656 = vmul.f32 %v645, %v652
        %v657 = vmul.f32 %v647, %v653
        %v658 = vmul.f32 %v649, %v654
        %v659 = vmul.f32 %v651, %v655
        %v660 = vrot.slane %v656, 4
        %v661 = vadd.f32 %v656, %v660
        %v662 = vrot.slane %v661, 2
        %v663 = vadd.f32 %v661, %v662
        %v664 = vrot.slane %v663, 1
        %v665 = vadd.f32 %v663, %v664
        %v666 = vrot.slane %v657, 4
        %v667 = vadd.f32 %v657, %v666
        %v668 = vrot.slane %v667, 2
        %v669 = vadd.f32 %v667, %v668
        %v670 = vrot.slane %v669, 1
        %v671 = vadd.f32 %v669, %v670
        %v672 = vrot.slane %v658, 4
        %v673 = vadd.f32 %v658, %v672
        %v674 = vrot.slane %v673, 2
        %v675 = vadd.f32 %v673, %v674
        %v676 = vrot.slane %v675, 1
        %v677 = vadd.f32 %v675, %v676
        %v678 = vrot.slane %v659, 4
        %v679 = vadd.f32 %v659, %v678
        %v680 = vrot.slane %v679, 2
        %v681 = vadd.f32 %v679, %v680
        %v682 = vrot.slane %v681, 1
        %v683 = vadd.f32 %v681, %v682
        %v688 = vcombine.low %v665, %v671
        %v689 = vcombine.low %v677, %v683
        %v691 = vunpack.c.l.s4 1966171168
        %v692 = vunpack.c.0.s8 %v691
        %v693 = vlaneseq
        %v694 = vshrl.u32 %v693, 7
        %v695 = vsub.s32 %v692, %v694
        %v696 = vrot.slane %v688, %v695
        %v698 = vunpack.c.l.s4 1966171168
        %v699 = vunpack.c.0.s8 %v698
        %v700 = vlaneseq
        %v701 = vshrl.u32 %v700, 7
        %v702 = vsub.s32 %v699, %v701
        %v703 = vrot.slane %v689, %v702
        %v704 = vcombine.low %v696, %v703
        %v706 = vunpack.c.l.s4 1966171168
        %v707 = vunpack.c.0.s8 %v706
        %v708 = vlaneseq
        %v709 = vshrl.u32 %v708, 7
        %v710 = vsub.s32 %v707, %v709
        %v711 = vrot.slane %v704, %v710
        %v713 = vlaneseq
        %vm714 = vcmp.ge.s32.totalorder %v713, 0
        %vm715 = vcmp.lt.s32.totalorder %v713, 512
        %vm716 = vmand %vm714, %vm715
        %717 = vst.msk [vmem:[%s326] sm:$0xf] %vm716, %v711
        %s718 = sand.u32 %s173, 1
        %s719 = scalar_lea.sflag [#allocation4], %s718
        %s720 = sand.u32 %s173, 1
        %s721 = smul.addr %s720, 4
        %s722 = scalar_lea.vmem [#allocation7], %s721
        // Predicated region
        $region49: #{tpu_custom_call.1} parent=39 // pred_check
          %p723 = pneg %p183
        $region50: #{tpu_custom_call.1} parent=39 // pred_check_branch
          %725 = sbr.rel (%p723) target = $region52
        $region51: #{tpu_custom_call.1} parent=39 // pred_region
          %s726 = smul.u32 4, %s30
          %s728 = ssub.s32 64, 64
          %729 = vsyncadd %s719, %s728
          %s730 = smul.addr %s29, 4
          %s731 = sadd.s32 %s726, %s730
          %s732 = smul.addr %s731, 16
          %s733 = scalar_lea.hbm %s5, %s732
          %s735 = sshll.u32 %s722, 4
          %s736 = int_to_ptr.vmem [resolvable:$true] %s735
          %738 = dma.vmem_to_hbm [thread:$0]  %s736, 64, %s733, %s719
        $region52: #{tpu_custom_call.1} parent=39 // pred_fallthru
          _
      $region40: #{tpu_custom_call.1} parent=5 // pred_fallthru
        _
      %p739 = scmp.le.s32.totalorder 2, %s20
      // Predicated region
      $region53: #{tpu_custom_call.1} parent=5 // pred_check
        %p740 = pneg %p739
      $region54: #{tpu_custom_call.1} parent=5 // pred_check_branch
        %742 = sbr.rel (%p740) target = $region56
      $region55: #{tpu_custom_call.1} parent=5 // pred_region
        %s743 = ssub.s32 %s20, 2
        // Predicated region
        $region57: #{tpu_custom_call.1} parent=55 // pred_check
          %p744 = pneg %p189
        $region58: #{tpu_custom_call.1} parent=55 // pred_check_branch
          %746 = sbr.rel (%p744) target = $region60
        $region59: #{tpu_custom_call.1} parent=55 // pred_region
          %s747 = sand.u32 %s174, 1
          %s748 = scalar_lea.sflag [#allocation4], %s747
          %s749 = sand.u32 %s174, 1
          %s750 = smul.addr %s749, 4
          %s751 = scalar_lea.vmem [#allocation7], %s750
          %752 = dma.done %s748, 64
        $region60: #{tpu_custom_call.1} parent=55 // pred_fallthru
          _
      $region56: #{tpu_custom_call.1} parent=5 // pred_fallthru
        _
    $region6: #{tpu_custom_call.1} parent=1 // loop_footer
      %s24 = sadd.s32 1, %s20
    $region7: #{tpu_custom_call.1} parent=1 // loop_footer_branch
      %19 = sbr.rel target = $region3
    $region8: #{tpu_custom_call.1} parent=1 // loop_exit
      _
    %753 = vsyncpa [#allocation3], 1
    %s754 = scalar_lea.sflag [#allocation3], 1
    %755 = vsyncpa %s754, 1
    %756 = vsyncpa [#allocation6], 1
    %s757 = scalar_lea.sflag [#allocation6], 1
    %758 = vsyncpa %s757, 1
    %759 = vsyncpa [#allocation4], 1
    %s760 = scalar_lea.sflag [#allocation4], 1
    %761 = vsyncpa %s760, 1

</llo_original>
